<compile_context>
chip_gen: v7x
topology: tpu7x:2x2x1
jax: 0.10.0
libtpu: 0.0.40
codegen_flags: <defaults>
</compile_context>

<pallas_src>
import math
import jax
import jax.numpy as jnp
from jax.experimental import pallas as pl
from jax.experimental.pallas import tpu as pltpu


def _round_up(n, m):
    return ((n + m - 1) // m) * m


def _disc_kernel(x_ref, w1_ref, b1_ref, w2_ref, b2_ref,
                 w3_ref, b3_ref, w4_ref, b4_ref, o_ref):
    # x_ref: [2, tb] f32 (batch on lanes).  Weights are stored transposed
    # ([out, in]) so every layer is h^T <- W^T @ h^T with N = tb lane-dense.
    x = x_ref[...]                                     # [2, tb]  f32
    w1 = w1_ref[...]                                   # [256, 2] f32

    # ---- Layer 1: Linear(2, 256) + ReLU on the VPU (K=2 would waste MXU) --
    h1 = (w1[:, 0:1] * x[0:1, :] + w1[:, 1:2] * x[1:2, :]) + b1_ref[...]
    h1 = jnp.maximum(h1, 0.0)                          # [256, tb] f32

    # ---- Layer 2: Linear(256, 128) + ReLU, MXU bf16-in / f32-accumulate ---
    h2 = jnp.dot(w2_ref[...], h1.astype(jnp.bfloat16),
                 preferred_element_type=jnp.float32)   # [128, tb]
    h2 = jnp.maximum(h2 + b2_ref[...], 0.0)

    # ---- Layer 3: Linear(128, 64) + ReLU ----------------------------------
    h3 = jnp.dot(w3_ref[...], h2.astype(jnp.bfloat16),
                 preferred_element_type=jnp.float32)   # [64, tb]
    h3 = jnp.maximum(h3 + b3_ref[...], 0.0)

    # ---- Layer 4: Linear(64, 1) + Sigmoid ([1,64]@[64,tb] -> lane-dense) --
    logits = jnp.dot(w4_ref[...], h3.astype(jnp.bfloat16),
                     preferred_element_type=jnp.float32) + b4_ref[...]
    o_ref[...] = jax.nn.sigmoid(logits).astype(o_ref.dtype)     # [1, tb]


def discriminator_forward(x, params, *, tb=512):
    """x: [B, 2] float32.  Returns [B, 1] float32 in (0, 1)."""
    B, F = x.shape
    assert F == 2
    (w1, b1), (w2, b2), (w3, b3), (w4, b4) = params

    # Batch tile: multiple of 128 lanes, no larger than the (padded) batch.
    tb = min(tb, _round_up(B, 128))
    tb = _round_up(tb, 128)
    Bp = _round_up(B, tb)

    # Transposed, lane-dense operands.
    xt = jnp.pad(x.astype(jnp.float32).T, ((0, 0), (0, Bp - B)))   # [2, Bp]
    w1t = w1.T.astype(jnp.float32)                    # [256, 2]  (VPU layer)
    w2t = w2.T.astype(jnp.bfloat16)                   # [128, 256]
    w3t = w3.T.astype(jnp.bfloat16)                   # [64, 128]
    w4t = w4.T.astype(jnp.bfloat16)                   # [1, 64]
    b1c, b2c, b3c, b4c = (b.reshape(-1, 1).astype(jnp.float32)
                          for b in (b1, b2, b3, b4))

    grid = (Bp // tb,)
    resident = lambda a: pl.BlockSpec(a.shape, lambda i: (0, 0))

    flops = 2 * B * (2 * 256 + 256 * 128 + 128 * 64 + 64 * 1)
    weight_bytes = int(w1t.size * 4 + w2t.size * 2 + w3t.size * 2
                       + w4t.size * 2
                       + (b1.size + b2.size + b3.size + b4.size) * 4)
    cost = pl.CostEstimate(flops=flops, transcendentals=B,
                           bytes_accessed=B * 2 * 4 + B * 4 + weight_bytes)

    out_t = pl.pallas_call(
        _disc_kernel,
        out_shape=jax.ShapeDtypeStruct((1, Bp), jnp.float32),
        grid_spec=pltpu.PrefetchScalarGridSpec(
            num_scalar_prefetch=0,
            grid=grid,
            in_specs=[
                pl.BlockSpec((2, tb), lambda i: (0, i)),   # x^T batch tile
                resident(w1t), resident(b1c),
                resident(w2t), resident(b2c),
                resident(w3t), resident(b3c),
                resident(w4t), resident(b4c),
            ],
            out_specs=pl.BlockSpec((1, tb), lambda i: (0, i)),  # lane-dense
        ),
        compiler_params=pltpu.CompilerParams(
            dimension_semantics=("parallel",)),
        cost_estimate=cost,
    )(xt, w1t, b1c, w2t, b2c, w3t, b3c, w4t, b4c)

    return out_t[:, :B].T                              # [B, 1]


def init_params(key):
    """Deterministic PyTorch-style init.  Weights stored as [in, out]."""
    dims = [(2, 256), (256, 128), (128, 64), (64, 1)]
    params = []
    for fan_in, fan_out in dims:
        key, kw, kb = jax.random.split(key, 3)
        bound = 1.0 / math.sqrt(fan_in)
        w = jax.random.uniform(kw, (fan_in, fan_out), jnp.float32, -bound, bound)
        b = jax.random.uniform(kb, (fan_out,), jnp.float32, -bound, bound)
        params.append((w, b))
    return params


def reference_forward(x, params, *, emulate_kernel_precision=True):
    """Pure-JAX reference.  When emulate_kernel_precision, replicates the
    kernel's bf16-input / f32-accumulate matmuls on layers 2-4."""
    (w1, b1), (w2, b2), (w3, b3), (w4, b4) = params

    def dot(h, w):
        if emulate_kernel_precision:
            return jnp.dot(h.astype(jnp.bfloat16), w.astype(jnp.bfloat16),
                           preferred_element_type=jnp.float32)
        return jnp.dot(h, w)

    h = jnp.maximum(x @ w1 + b1, 0.0)          # layer 1 is f32 in the kernel
    h = jnp.maximum(dot(h, w2) + b2, 0.0)
    h = jnp.maximum(dot(h, w3) + b3, 0.0)
    return jax.nn.sigmoid(dot(h, w4) + b4)


if __name__ == "__main__":
    key = jax.random.PRNGKey(0)
    kx, kp = jax.random.split(key)

    B = 256                                    # small batch of 2-D points
    x = jax.random.normal(kx, (B, 2), jnp.float32)
    params = init_params(kp)

    out = discriminator_forward(x, params, tb=128)   # grid = (2,) parallel steps
    out = jax.block_until_ready(out)

    ref = reference_forward(x, params)                               # kernel-precision ref
    ref_f32 = reference_forward(x, params, emulate_kernel_precision=False)
    assert out.shape == (B, 1)
    assert bool(jnp.all((out > 0.0) & (out < 1.0)))
    assert jnp.allclose(out, ref, atol=2e-3, rtol=1e-3), \
        float(jnp.max(jnp.abs(out - ref)))
    assert jnp.allclose(out, ref_f32, atol=5e-2), \
        float(jnp.max(jnp.abs(out - ref_f32)))
    print("KERNEL_OK")
</pallas_src>

<mosaic_0001>
module attributes {stable_mosaic.version = 11 : i64} {
  func.func @_disc_kernel(%arg0: i32, %arg1: memref<2x128xf32, #tpu.memory_space<vmem>>, %arg2: memref<256x2xf32, #tpu.memory_space<vmem>>, %arg3: memref<256x1xf32, #tpu.memory_space<vmem>>, %arg4: memref<128x256xbf16, #tpu.memory_space<vmem>>, %arg5: memref<128x1xf32, #tpu.memory_space<vmem>>, %arg6: memref<64x128xbf16, #tpu.memory_space<vmem>>, %arg7: memref<64x1xf32, #tpu.memory_space<vmem>>, %arg8: memref<1x64xbf16, #tpu.memory_space<vmem>>, %arg9: memref<1x1xf32, #tpu.memory_space<vmem>>, %arg10: memref<1x128xf32, #tpu.memory_space<vmem>>) attributes {dimension_semantics = [#tpu.dimension_semantics<parallel>], iteration_bounds = array<i64: 2>, scalar_prefetch = 0 : i64, scratch_operands = 0 : i64, tpu.core_type = #tpu.core_type<tc>, window_params = [{transform_indices = @transform_0, window_bounds = array<i64: 2, 128>}, {pipeline_mode = #tpu.pipeline_mode<synchronous>, transform_indices = @transform_1, window_bounds = array<i64: 256, 2>}, {pipeline_mode = #tpu.pipeline_mode<synchronous>, transform_indices = @transform_2, window_bounds = array<i64: 256, 1>}, {pipeline_mode = #tpu.pipeline_mode<synchronous>, transform_indices = @transform_3, window_bounds = array<i64: 128, 256>}, {pipeline_mode = #tpu.pipeline_mode<synchronous>, transform_indices = @transform_4, window_bounds = array<i64: 128, 1>}, {pipeline_mode = #tpu.pipeline_mode<synchronous>, transform_indices = @transform_5, window_bounds = array<i64: 64, 128>}, {pipeline_mode = #tpu.pipeline_mode<synchronous>, transform_indices = @transform_6, window_bounds = array<i64: 64, 1>}, {pipeline_mode = #tpu.pipeline_mode<synchronous>, transform_indices = @transform_7, window_bounds = array<i64: 1, 64>}, {pipeline_mode = #tpu.pipeline_mode<synchronous>, transform_indices = @transform_8, window_bounds = array<i64: 1, 1>}, {transform_indices = @transform_9, window_bounds = array<i64: 1, 128>}]} {
    %c0 = arith.constant 0 : index
    %c0_0 = arith.constant 0 : index
    %0 = vector.load %arg1[%c0, %c0_0] : memref<2x128xf32, #tpu.memory_space<vmem>>, vector<2x128xf32>
    %c0_1 = arith.constant 0 : index
    %c0_2 = arith.constant 0 : index
    %1 = vector.load %arg2[%c0_1, %c0_2] : memref<256x2xf32, #tpu.memory_space<vmem>>, vector<256x2xf32>
    %2 = vector.extract_strided_slice %1 {offsets = [0, 0], sizes = [256, 1], strides = [1, 1]} : vector<256x2xf32> to vector<256x1xf32>
    %3 = vector.extract_strided_slice %0 {offsets = [0, 0], sizes = [1, 128], strides = [1, 1]} : vector<2x128xf32> to vector<1x128xf32>
    %4 = vector.broadcast %2 : vector<256x1xf32> to vector<256x128xf32>
    %5 = vector.broadcast %3 : vector<1x128xf32> to vector<256x128xf32>
    %6 = arith.mulf %4, %5 : vector<256x128xf32>
    %7 = vector.extract_strided_slice %1 {offsets = [0, 1], sizes = [256, 1], strides = [1, 1]} : vector<256x2xf32> to vector<256x1xf32>
    %8 = vector.extract_strided_slice %0 {offsets = [1, 0], sizes = [1, 128], strides = [1, 1]} : vector<2x128xf32> to vector<1x128xf32>
    %9 = vector.broadcast %7 : vector<256x1xf32> to vector<256x128xf32>
    %10 = vector.broadcast %8 : vector<1x128xf32> to vector<256x128xf32>
    %11 = arith.mulf %9, %10 : vector<256x128xf32>
    %12 = arith.addf %6, %11 : vector<256x128xf32>
    %c0_3 = arith.constant 0 : index
    %c0_4 = arith.constant 0 : index
    %13 = vector.load %arg3[%c0_3, %c0_4] : memref<256x1xf32, #tpu.memory_space<vmem>>, vector<256x1xf32>
    %14 = vector.broadcast %13 : vector<256x1xf32> to vector<256x128xf32>
    %15 = arith.addf %12, %14 : vector<256x128xf32>
    %cst = arith.constant 0.000000e+00 : f32
    %16 = vector.broadcast %cst : f32 to vector<256x128xf32>
    %17 = arith.maximumf %15, %16 : vector<256x128xf32>
    %c0_5 = arith.constant 0 : index
    %c0_6 = arith.constant 0 : index
    %18 = vector.load %arg4[%c0_5, %c0_6] : memref<128x256xbf16, #tpu.memory_space<vmem>>, vector<128x256xbf16>
    %19 = arith.truncf %17 : vector<256x128xf32> to vector<256x128xbf16>
    %cst_7 = arith.constant dense<0.000000e+00> : vector<128x128xf32>
    %20 = tpu.matmul %18, %19, %cst_7 {dimension_numbers = #tpu.dot_dimension_numbers<[1], [0], [0], [1], [0, 0, 1, 1], [], []>} : vector<128x256xbf16>, vector<256x128xbf16>, vector<128x128xf32> -> vector<128x128xf32>
    %c0_8 = arith.constant 0 : index
    %c0_9 = arith.constant 0 : index
    %21 = vector.load %arg5[%c0_8, %c0_9] : memref<128x1xf32, #tpu.memory_space<vmem>>, vector<128x1xf32>
    %22 = vector.broadcast %21 : vector<128x1xf32> to vector<128x128xf32>
    %23 = arith.addf %20, %22 : vector<128x128xf32>
    %cst_10 = arith.constant 0.000000e+00 : f32
    %24 = vector.broadcast %cst_10 : f32 to vector<128x128xf32>
    %25 = arith.maximumf %23, %24 : vector<128x128xf32>
    %c0_11 = arith.constant 0 : index
    %c0_12 = arith.constant 0 : index
    %26 = vector.load %arg6[%c0_11, %c0_12] : memref<64x128xbf16, #tpu.memory_space<vmem>>, vector<64x128xbf16>
    %27 = arith.truncf %25 : vector<128x128xf32> to vector<128x128xbf16>
    %cst_13 = arith.constant dense<0.000000e+00> : vector<64x128xf32>
    %28 = tpu.matmul %26, %27, %cst_13 {dimension_numbers = #tpu.dot_dimension_numbers<[1], [0], [0], [1], [0, 0, 1, 1], [], []>} : vector<64x128xbf16>, vector<128x128xbf16>, vector<64x128xf32> -> vector<64x128xf32>
    %c0_14 = arith.constant 0 : index
    %c0_15 = arith.constant 0 : index
    %29 = vector.load %arg7[%c0_14, %c0_15] : memref<64x1xf32, #tpu.memory_space<vmem>>, vector<64x1xf32>
    %30 = vector.broadcast %29 : vector<64x1xf32> to vector<64x128xf32>
    %31 = arith.addf %28, %30 : vector<64x128xf32>
    %cst_16 = arith.constant 0.000000e+00 : f32
    %32 = vector.broadcast %cst_16 : f32 to vector<64x128xf32>
    %33 = arith.maximumf %31, %32 : vector<64x128xf32>
    %c0_17 = arith.constant 0 : index
    %c0_18 = arith.constant 0 : index
    %34 = vector.load %arg8[%c0_17, %c0_18] : memref<1x64xbf16, #tpu.memory_space<vmem>>, vector<1x64xbf16>
    %35 = arith.truncf %33 : vector<64x128xf32> to vector<64x128xbf16>
    %cst_19 = arith.constant dense<0.000000e+00> : vector<1x128xf32>
    %36 = tpu.matmul %34, %35, %cst_19 {dimension_numbers = #tpu.dot_dimension_numbers<[1], [0], [0], [1], [0, 0, 1, 1], [], []>} : vector<1x64xbf16>, vector<64x128xbf16>, vector<1x128xf32> -> vector<1x128xf32>
    %c0_20 = arith.constant 0 : index
    %c0_21 = arith.constant 0 : index
    %37 = vector.load %arg9[%c0_20, %c0_21] : memref<1x1xf32, #tpu.memory_space<vmem>>, vector<1x1xf32>
    %38 = vector.broadcast %37 : vector<1x1xf32> to vector<1x128xf32>
    %39 = arith.addf %36, %38 : vector<1x128xf32>
    %40 = arith.negf %39 : vector<1x128xf32>
    %41 = math.exp %40 : vector<1x128xf32>
    %cst_22 = arith.constant 1.000000e+00 : f32
    %42 = vector.broadcast %cst_22 : f32 to vector<1x128xf32>
    %43 = arith.addf %42, %41 : vector<1x128xf32>
    %44 = arith.divf %42, %43 : vector<1x128xf32>
    %c0_23 = arith.constant 0 : index
    %c0_24 = arith.constant 0 : index
    %45 = vector.load %arg10[%c0_23, %c0_24] : memref<1x128xf32, #tpu.memory_space<vmem>>, vector<1x128xf32>
    tpu.vector_store %arg10[%c0_23, %c0_24], %44 {strides = array<i32>} : memref<1x128xf32, #tpu.memory_space<vmem>>, vector<1x128xf32>,
    return
  }
  func.func @transform_0(%arg0: i32) -> (i32, i32) {
    %c0_i32 = arith.constant 0 : i32
    %c0_i32_0 = arith.constant 0 : i32
    return %c0_i32, %arg0 : i32, i32
  }
  func.func @transform_1(%arg0: i32) -> (i32, i32) {
    %c0_i32 = arith.constant 0 : i32
    %c0_i32_0 = arith.constant 0 : i32
    %c0_i32_1 = arith.constant 0 : i32
    return %c0_i32, %c0_i32_0 : i32, i32
  }
  func.func @transform_2(%arg0: i32) -> (i32, i32) {
    %c0_i32 = arith.constant 0 : i32
    %c0_i32_0 = arith.constant 0 : i32
    %c0_i32_1 = arith.constant 0 : i32
    return %c0_i32, %c0_i32_0 : i32, i32
  }
  func.func @transform_3(%arg0: i32) -> (i32, i32) {
    %c0_i32 = arith.constant 0 : i32
    %c0_i32_0 = arith.constant 0 : i32
    %c0_i32_1 = arith.constant 0 : i32
    return %c0_i32, %c0_i32_0 : i32, i32
  }
  func.func @transform_4(%arg0: i32) -> (i32, i32) {
    %c0_i32 = arith.constant 0 : i32
    %c0_i32_0 = arith.constant 0 : i32
    %c0_i32_1 = arith.constant 0 : i32
    return %c0_i32, %c0_i32_0 : i32, i32
  }
  func.func @transform_5(%arg0: i32) -> (i32, i32) {
    %c0_i32 = arith.constant 0 : i32
    %c0_i32_0 = arith.constant 0 : i32
    %c0_i32_1 = arith.constant 0 : i32
    return %c0_i32, %c0_i32_0 : i32, i32
  }
  func.func @transform_6(%arg0: i32) -> (i32, i32) {
    %c0_i32 = arith.constant 0 : i32
    %c0_i32_0 = arith.constant 0 : i32
    %c0_i32_1 = arith.constant 0 : i32
    return %c0_i32, %c0_i32_0 : i32, i32
  }
  func.func @transform_7(%arg0: i32) -> (i32, i32) {
    %c0_i32 = arith.constant 0 : i32
    %c0_i32_0 = arith.constant 0 : i32
    %c0_i32_1 = arith.constant 0 : i32
    return %c0_i32, %c0_i32_0 : i32, i32
  }
  func.func @transform_8(%arg0: i32) -> (i32, i32) {
    %c0_i32 = arith.constant 0 : i32
    %c0_i32_0 = arith.constant 0 : i32
    %c0_i32_1 = arith.constant 0 : i32
    return %c0_i32, %c0_i32_0 : i32, i32
  }
  func.func @transform_9(%arg0: i32) -> (i32, i32) {
    %c0_i32 = arith.constant 0 : i32
    %c0_i32_0 = arith.constant 0 : i32
    return %c0_i32, %arg0 : i32, i32
  }
}

</mosaic_0001>

<llo_original>
// kernel: tpu_custom_call.1
$region0: #{tpu_custom_call.1}
  #allocation0 [shape = 'u32[]', space=smem, size = 0x4, offset = 0x4, fixed_abs, tag = 'smem constant byte address 0x4 - core index']
  #allocation1 [shape = 'u32[144,128]{1,0:T(1,128)}', space=vmem, size = 0x12000, scoped, tag = 'internal scratch']
  #allocation2 [shape = 'f32[1,1]{1,0:T(1,128)S(1)}', space=vmem, size = 0x200, scoped, tag = 'scoped memory for tpu_custom_call.1']
  %s0 = inlined_call_operand.vmem [shape: f32[2,256], index: 0, kind: input, shape index: {}]
  %s1 = inlined_call_operand.vmem [shape: f32[256,2], index: 1, kind: input, shape index: {}]
  %s2 = inlined_call_operand.vmem [shape: f32[256,1], index: 2, kind: input, shape index: {}]
  %s3 = inlined_call_operand.vmem [shape: bf16[128,256], index: 3, kind: input, shape index: {}]
  %s4 = inlined_call_operand.vmem [shape: f32[128,1], index: 4, kind: input, shape index: {}]
  %s5 = inlined_call_operand.vmem [shape: bf16[64,128], index: 5, kind: input, shape index: {}]
  %s6 = inlined_call_operand.vmem [shape: f32[64,1], index: 6, kind: input, shape index: {}]
  %s7 = inlined_call_operand.vmem [shape: bf16[1,64], index: 7, kind: input, shape index: {}]
  %s8 = inlined_call_operand.<no memory space> [shape: f32[1,1], index: 8, kind: input, shape index: {}]
  %s9 = inlined_call_operand.hbm [shape: f32[1,256], index: 9, kind: output, shape index: {}]
  %s10 = sld [smem:[#allocation0]]
  $region69: #{tpu_custom_call.1} parent=0
    _
  %s12 = ssub.s32 1, %s10
  %s13 = scalar_select 0, %s12, %s10
  %v14 = vstv %s8
  %15 = vst [vmem:[#allocation2] sm:$0x1] %v14
  $region1: #{tpu_custom_call.1} parent=0
    #allocation3 [shape = 'u8[1024]{0}', space=vmem, size = 0x400, scoped, tag = 'output window, operand 0']
    #allocation4 [shape = 's32[2]{0}', space=sflag, size = 0x8, scoped, tag = 'scoped memory for tpu_custom_call.1']
    %16 = vsyncpa [#allocation4], 0
    %s17 = scalar_lea.sflag [#allocation4], 1
    %18 = vsyncpa %s17, 0
    loop: start=0, step=1, limit=4
    $region2: #{tpu_custom_call.1} parent=1 // loop_pre_header
      _
    $region3: #{tpu_custom_call.1} parent=1 // loop_header
      %s20 = sphi 0, %s24
      %p21 = scmp.ge.s32.totalorder %s20, 4
      %s30 = sphi 0, %s32
      %s33 = sphi 0, %s30
      %s34 = sphi 0, %s33
      %s50 = sphi 0, %s34
      %s54 = sphi 0, %s54
      %s56 = sphi 0, %s54
      %s57 = sphi 0, %s56
      %s71 = sphi 0, %s57
      %s75 = sphi 0, %s75
      %s77 = sphi 0, %s75
      %s78 = sphi 0, %s77
      %s92 = sphi 0, %s78
      %s96 = sphi 0, %s96
      %s98 = sphi 0, %s96
      %s99 = sphi 0, %s98
      %s113 = sphi 0, %s99
      %s117 = sphi 0, %s117
      %s119 = sphi 0, %s117
      %s120 = sphi 0, %s119
      %s134 = sphi 0, %s120
      %s138 = sphi 0, %s138
      %s140 = sphi 0, %s138
      %s141 = sphi 0, %s140
      %s155 = sphi 0, %s141
      %s159 = sphi 0, %s159
      %s161 = sphi 0, %s159
      %s162 = sphi 0, %s161
      %s176 = sphi 0, %s162
      %s180 = sphi 0, %s180
      %s182 = sphi 0, %s180
      %s183 = sphi 0, %s182
      %s197 = sphi 0, %s183
      %s201 = sphi 0, %s201
      %s203 = sphi 0, %s201
      %s204 = sphi 0, %s203
      %s218 = sphi 0, %s204
      %s224 = sphi 0, %s226
      %s227 = sphi 0, %s224
      %s228 = sphi 0, %s227
      %s244 = sphi 0, %s228
    $region4: #{tpu_custom_call.1} parent=1 // loop_header_branch
      %23 = sbr.rel (%p21) target = $region8
    $region5: #{tpu_custom_call.1} parent=1 // loop_body
      %s25 = ssub.s32 %s20, 1
      %s26 = ssub.s32 %s20, 2
      %s27 = sadd.s32 %s20, 1
      %s28 = ssub.s32 %s20, %s27
      %p29 = scmp.eq.s32.totalorder %s28, 0
      %s31 = sadd.s32 %s30, 1
      %s32 = scalar_select %p29, %s30, %s31
      %p35 = pneg %p29
      %p36 = scmp.eq.s32.totalorder %s20, 1
      %p37 = por %p35, %p36
      %p38 = scmp.ne.s32.totalorder %s30, %s33
      %p39 = scmp.eq.s32.totalorder %s20, 0
      %p40 = por %p38, %p39
      %p41 = scmp.ne.s32.totalorder %s30, %s33
      %p42 = scmp.eq.s32.totalorder %s25, 1
      %p43 = por %p41, %p42
      %p44 = scmp.ne.s32.totalorder %s33, %s34
      %p45 = scmp.eq.s32.totalorder %s25, 0
      %p46 = por %p44, %p45
      %p47 = scmp.ne.s32.totalorder %s33, %s34
      %p48 = scmp.eq.s32.totalorder %s26, 1
      %p49 = por %p47, %p48
      %p51 = scmp.ne.s32.totalorder %s34, %s50
      %p52 = scmp.eq.s32.totalorder %s26, 0
      %p53 = por %p51, %p52
      %s55 = sadd.s32 %s54, 1
      %p58 = scmp.eq.s32.totalorder %s20, 1
      %p59 = scmp.ne.s32.totalorder %s54, %s56
      %p60 = scmp.eq.s32.totalorder %s20, 0
      %p61 = por %p59, %p60
      %p62 = scmp.ne.s32.totalorder %s54, %s56
      %p63 = scmp.eq.s32.totalorder %s25, 1
      %p64 = por %p62, %p63
      %p65 = scmp.ne.s32.totalorder %s56, %s57
      %p66 = scmp.eq.s32.totalorder %s25, 0
      %p67 = por %p65, %p66
      %p68 = scmp.ne.s32.totalorder %s56, %s57
      %p69 = scmp.eq.s32.totalorder %s26, 1
      %p70 = por %p68, %p69
      %p72 = scmp.ne.s32.totalorder %s57, %s71
      %p73 = scmp.eq.s32.totalorder %s26, 0
      %p74 = por %p72, %p73
      %s76 = sadd.s32 %s75, 1
      %p79 = scmp.eq.s32.totalorder %s20, 1
      %p80 = scmp.ne.s32.totalorder %s75, %s77
      %p81 = scmp.eq.s32.totalorder %s20, 0
      %p82 = por %p80, %p81
      %p83 = scmp.ne.s32.totalorder %s75, %s77
      %p84 = scmp.eq.s32.totalorder %s25, 1
      %p85 = por %p83, %p84
      %p86 = scmp.ne.s32.totalorder %s77, %s78
      %p87 = scmp.eq.s32.totalorder %s25, 0
      %p88 = por %p86, %p87
      %p89 = scmp.ne.s32.totalorder %s77, %s78
      %p90 = scmp.eq.s32.totalorder %s26, 1
      %p91 = por %p89, %p90
      %p93 = scmp.ne.s32.totalorder %s78, %s92
      %p94 = scmp.eq.s32.totalorder %s26, 0
      %p95 = por %p93, %p94
      %s97 = sadd.s32 %s96, 1
      %p100 = scmp.eq.s32.totalorder %s20, 1
      %p101 = scmp.ne.s32.totalorder %s96, %s98
      %p102 = scmp.eq.s32.totalorder %s20, 0
      %p103 = por %p101, %p102
      %p104 = scmp.ne.s32.totalorder %s96, %s98
      %p105 = scmp.eq.s32.totalorder %s25, 1
      %p106 = por %p104, %p105
      %p107 = scmp.ne.s32.totalorder %s98, %s99
      %p108 = scmp.eq.s32.totalorder %s25, 0
      %p109 = por %p107, %p108
      %p110 = scmp.ne.s32.totalorder %s98, %s99
      %p111 = scmp.eq.s32.totalorder %s26, 1
      %p112 = por %p110, %p111
      %p114 = scmp.ne.s32.totalorder %s99, %s113
      %p115 = scmp.eq.s32.totalorder %s26, 0
      %p116 = por %p114, %p115
      %s118 = sadd.s32 %s117, 1
      %p121 = scmp.eq.s32.totalorder %s20, 1
      %p122 = scmp.ne.s32.totalorder %s117, %s119
      %p123 = scmp.eq.s32.totalorder %s20, 0
      %p124 = por %p122, %p123
      %p125 = scmp.ne.s32.totalorder %s117, %s119
      %p126 = scmp.eq.s32.totalorder %s25, 1
      %p127 = por %p125, %p126
      %p128 = scmp.ne.s32.totalorder %s119, %s120
      %p129 = scmp.eq.s32.totalorder %s25, 0
      %p130 = por %p128, %p129
      %p131 = scmp.ne.s32.totalorder %s119, %s120
      %p132 = scmp.eq.s32.totalorder %s26, 1
      %p133 = por %p131, %p132
      %p135 = scmp.ne.s32.totalorder %s120, %s134
      %p136 = scmp.eq.s32.totalorder %s26, 0
      %p137 = por %p135, %p136
      %s139 = sadd.s32 %s138, 1
      %p142 = scmp.eq.s32.totalorder %s20, 1
      %p143 = scmp.ne.s32.totalorder %s138, %s140
      %p144 = scmp.eq.s32.totalorder %s20, 0
      %p145 = por %p143, %p144
      %p146 = scmp.ne.s32.totalorder %s138, %s140
      %p147 = scmp.eq.s32.totalorder %s25, 1
      %p148 = por %p146, %p147
      %p149 = scmp.ne.s32.totalorder %s140, %s141
      %p150 = scmp.eq.s32.totalorder %s25, 0
      %p151 = por %p149, %p150
      %p152 = scmp.ne.s32.totalorder %s140, %s141
      %p153 = scmp.eq.s32.totalorder %s26, 1
      %p154 = por %p152, %p153
      %p156 = scmp.ne.s32.totalorder %s141, %s155
      %p157 = scmp.eq.s32.totalorder %s26, 0
      %p158 = por %p156, %p157
      %s160 = sadd.s32 %s159, 1
      %p163 = scmp.eq.s32.totalorder %s20, 1
      %p164 = scmp.ne.s32.totalorder %s159, %s161
      %p165 = scmp.eq.s32.totalorder %s20, 0
      %p166 = por %p164, %p165
      %p167 = scmp.ne.s32.totalorder %s159, %s161
      %p168 = scmp.eq.s32.totalorder %s25, 1
      %p169 = por %p167, %p168
      %p170 = scmp.ne.s32.totalorder %s161, %s162
      %p171 = scmp.eq.s32.totalorder %s25, 0
      %p172 = por %p170, %p171
      %p173 = scmp.ne.s32.totalorder %s161, %s162
      %p174 = scmp.eq.s32.totalorder %s26, 1
      %p175 = por %p173, %p174
      %p177 = scmp.ne.s32.totalorder %s162, %s176
      %p178 = scmp.eq.s32.totalorder %s26, 0
      %p179 = por %p177, %p178
      %s181 = sadd.s32 %s180, 1
      %p184 = scmp.eq.s32.totalorder %s20, 1
      %p185 = scmp.ne.s32.totalorder %s180, %s182
      %p186 = scmp.eq.s32.totalorder %s20, 0
      %p187 = por %p185, %p186
      %p188 = scmp.ne.s32.totalorder %s180, %s182
      %p189 = scmp.eq.s32.totalorder %s25, 1
      %p190 = por %p188, %p189
      %p191 = scmp.ne.s32.totalorder %s182, %s183
      %p192 = scmp.eq.s32.totalorder %s25, 0
      %p193 = por %p191, %p192
      %p194 = scmp.ne.s32.totalorder %s182, %s183
      %p195 = scmp.eq.s32.totalorder %s26, 1
      %p196 = por %p194, %p195
      %p198 = scmp.ne.s32.totalorder %s183, %s197
      %p199 = scmp.eq.s32.totalorder %s26, 0
      %p200 = por %p198, %p199
      %s202 = sadd.s32 %s201, 1
      %p205 = scmp.eq.s32.totalorder %s20, 1
      %p206 = scmp.ne.s32.totalorder %s201, %s203
      %p207 = scmp.eq.s32.totalorder %s20, 0
      %p208 = por %p206, %p207
      %p209 = scmp.ne.s32.totalorder %s201, %s203
      %p210 = scmp.eq.s32.totalorder %s25, 1
      %p211 = por %p209, %p210
      %p212 = scmp.ne.s32.totalorder %s203, %s204
      %p213 = scmp.eq.s32.totalorder %s25, 0
      %p214 = por %p212, %p213
      %p215 = scmp.ne.s32.totalorder %s203, %s204
      %p216 = scmp.eq.s32.totalorder %s26, 1
      %p217 = por %p215, %p216
      %p219 = scmp.ne.s32.totalorder %s204, %s218
      %p220 = scmp.eq.s32.totalorder %s26, 0
      %p221 = por %p219, %p220
      %s222 = ssub.s32 %s20, %s27
      %p223 = scmp.eq.s32.totalorder %s222, 0
      %s225 = sadd.s32 %s224, 1
      %s226 = scalar_select %p223, %s224, %s225
      %p229 = pneg %p223
      %p230 = scmp.eq.s32.totalorder %s20, 1
      %p231 = por %p229, %p230
      %p232 = scmp.ne.s32.totalorder %s224, %s227
      %p233 = scmp.eq.s32.totalorder %s20, 0
      %p234 = por %p232, %p233
      %p235 = scmp.ne.s32.totalorder %s224, %s227
      %p236 = scmp.eq.s32.totalorder %s25, 1
      %p237 = por %p235, %p236
      %p238 = scmp.ne.s32.totalorder %s227, %s228
      %p239 = scmp.eq.s32.totalorder %s25, 0
      %p240 = por %p238, %p239
      %p241 = scmp.ne.s32.totalorder %s227, %s228
      %p242 = scmp.eq.s32.totalorder %s26, 1
      %p243 = por %p241, %p242
      %p245 = scmp.ne.s32.totalorder %s228, %s244
      %p246 = scmp.eq.s32.totalorder %s26, 0
      %p247 = por %p245, %p246
      %p248 = scmp.le.s32.totalorder 1, %s20
      %p249 = scmp.lt.s32.totalorder %s20, 3
      %p250 = pnand %p248, %p249
      %p251 = pneg %p250
      // Predicated region
      $region9: #{tpu_custom_call.1} parent=5 // pred_check
        _
      $region10: #{tpu_custom_call.1} parent=5 // pred_check_branch
        %253 = sbr.rel (%p250) target = $region12
      $region11: #{tpu_custom_call.1} parent=5 // pred_region
        %s254 = ssub.s32 %s20, 1
        // Predicated region
        $region13: #{tpu_custom_call.1} parent=11 // pred_check
          %p255 = pneg %p67
        $region14: #{tpu_custom_call.1} parent=11 // pred_check_branch
          %257 = sbr.rel (%p255) target = $region16
        $region15: #{tpu_custom_call.1} parent=11 // pred_region
          _
        $region16: #{tpu_custom_call.1} parent=11 // pred_fallthru
          _
        // Predicated region
        $region17: #{tpu_custom_call.1} parent=11 // pred_check
          %p258 = pneg %p88
        $region18: #{tpu_custom_call.1} parent=11 // pred_check_branch
          %260 = sbr.rel (%p258) target = $region20
        $region19: #{tpu_custom_call.1} parent=11 // pred_region
          _
        $region20: #{tpu_custom_call.1} parent=11 // pred_fallthru
          _
        // Predicated region
        $region21: #{tpu_custom_call.1} parent=11 // pred_check
          %p261 = pneg %p109
        $region22: #{tpu_custom_call.1} parent=11 // pred_check_branch
          %263 = sbr.rel (%p261) target = $region24
        $region23: #{tpu_custom_call.1} parent=11 // pred_region
          _
        $region24: #{tpu_custom_call.1} parent=11 // pred_fallthru
          _
        // Predicated region
        $region25: #{tpu_custom_call.1} parent=11 // pred_check
          %p264 = pneg %p130
        $region26: #{tpu_custom_call.1} parent=11 // pred_check_branch
          %266 = sbr.rel (%p264) target = $region28
        $region27: #{tpu_custom_call.1} parent=11 // pred_region
          _
        $region28: #{tpu_custom_call.1} parent=11 // pred_fallthru
          _
        // Predicated region
        $region29: #{tpu_custom_call.1} parent=11 // pred_check
          %p267 = pneg %p151
        $region30: #{tpu_custom_call.1} parent=11 // pred_check_branch
          %269 = sbr.rel (%p267) target = $region32
        $region31: #{tpu_custom_call.1} parent=11 // pred_region
          _
        $region32: #{tpu_custom_call.1} parent=11 // pred_fallthru
          _
        // Predicated region
        $region33: #{tpu_custom_call.1} parent=11 // pred_check
          %p270 = pneg %p172
        $region34: #{tpu_custom_call.1} parent=11 // pred_check_branch
          %272 = sbr.rel (%p270) target = $region36
        $region35: #{tpu_custom_call.1} parent=11 // pred_region
          _
        $region36: #{tpu_custom_call.1} parent=11 // pred_fallthru
          _
        // Predicated region
        $region37: #{tpu_custom_call.1} parent=11 // pred_check
          %p273 = pneg %p193
        $region38: #{tpu_custom_call.1} parent=11 // pred_check_branch
          %275 = sbr.rel (%p273) target = $region40
        $region39: #{tpu_custom_call.1} parent=11 // pred_region
          _
        $region40: #{tpu_custom_call.1} parent=11 // pred_fallthru
          _
        // Predicated region
        $region41: #{tpu_custom_call.1} parent=11 // pred_check
          %p276 = pneg %p214
        $region42: #{tpu_custom_call.1} parent=11 // pred_check_branch
          %278 = sbr.rel (%p276) target = $region44
        $region43: #{tpu_custom_call.1} parent=11 // pred_region
          _
        $region44: #{tpu_custom_call.1} parent=11 // pred_fallthru
          _
      $region12: #{tpu_custom_call.1} parent=5 // pred_fallthru
        _
      %p279 = scmp.lt.s32.totalorder %s20, 2
      // Predicated region
      $region45: #{tpu_custom_call.1} parent=5 // pred_check
        %p280 = pneg %p279
      $region46: #{tpu_custom_call.1} parent=5 // pred_check_branch
        %282 = sbr.rel (%p280) target = $region48
      $region47: #{tpu_custom_call.1} parent=5 // pred_region
        // Predicated region
        $region49: #{tpu_custom_call.1} parent=47 // pred_check
          %p283 = pneg %p40
        $region50: #{tpu_custom_call.1} parent=47 // pred_check_branch
          %285 = sbr.rel (%p283) target = $region52
        $region51: #{tpu_custom_call.1} parent=47 // pred_region
          %p286 = scmp.lt.s32.totalorder %s20, 1
          %s287 = scalar_select %p286, %s20, 1
          %s288 = smul.addr %s287, 2
          %s289 = scalar_lea.vmem %s0, %s288
        $region52: #{tpu_custom_call.1} parent=47 // pred_fallthru
          _
      $region48: #{tpu_custom_call.1} parent=5 // pred_fallthru
        _
      %p290 = scmp.le.s32.totalorder 1, %s20
      %p291 = scmp.lt.s32.totalorder %s20, 3
      %p292 = pnand %p290, %p291
      %p293 = pneg %p292
      // Predicated region
      $region53: #{tpu_custom_call.1} parent=5 // pred_check
        _
      $region54: #{tpu_custom_call.1} parent=5 // pred_check_branch
        %295 = sbr.rel (%p292) target = $region56
      $region55: #{tpu_custom_call.1} parent=5 // pred_region
        %s296 = ssub.s32 %s20, 1
        %p297 = scmp.lt.s32.totalorder %s25, 1
        %s298 = scalar_select %p297, %s25, 1
        %s299 = smul.addr %s298, 2
        %s300 = scalar_lea.vmem %s0, %s299
        %p301 = pneg %p46
        %p302 = pneg %p43
        %p303 = pneg %p67
        %p304 = pneg %p64
        %p305 = pneg %p88
        %p306 = pneg %p85
        %p307 = pneg %p109
        %p308 = pneg %p106
        %p309 = pneg %p130
        %p310 = pneg %p127
        %p311 = pneg %p151
        %p312 = pneg %p148
        %p313 = pneg %p172
        %p314 = pneg %p169
        %p315 = pneg %p193
        %p316 = pneg %p190
        %p317 = pneg %p214
        %p318 = pneg %p211
        %p319 = pneg %p240
        %p320 = pneg %p237
        %s321 = sand.u32 %s227, 1
        %s322 = scalar_lea.sflag [#allocation4], %s321
        %s323 = sand.u32 %s227, 1
        %s324 = scalar_lea.vmem [#allocation3], %s323
        %p325 = scmp.lt.s32.totalorder %s25, 1
        %s326 = scalar_select %p325, %s25, 1
        %s327 = smul.addr %s326, 2
        %s328 = scalar_lea.vmem %s0, %s327
        %v330 = vld [vmem:[%s328] sm:$0x3]
        %v331 = vld [vmem:[%s1] sm:$0xff]
        %v332 = vld [vmem:[%s1 + $0x8] sm:$0xff]
        %v333 = vld [vmem:[%s1 + $0x10] sm:$0xff]
        %v334 = vld [vmem:[%s1 + $0x18] sm:$0xff]
        %v335 = vld [vmem:[%s1 + $0x20] sm:$0xff]
        %v336 = vld [vmem:[%s1 + $0x28] sm:$0xff]
        %v337 = vld [vmem:[%s1 + $0x30] sm:$0xff]
        %v338 = vld [vmem:[%s1 + $0x38] sm:$0xff]
        %v339 = vld [vmem:[%s1 + $0x40] sm:$0xff]
        %v340 = vld [vmem:[%s1 + $0x48] sm:$0xff]
        %v341 = vld [vmem:[%s1 + $0x50] sm:$0xff]
        %v342 = vld [vmem:[%s1 + $0x58] sm:$0xff]
        %v343 = vld [vmem:[%s1 + $0x60] sm:$0xff]
        %v344 = vld [vmem:[%s1 + $0x68] sm:$0xff]
        %v345 = vld [vmem:[%s1 + $0x70] sm:$0xff]
        %v346 = vld [vmem:[%s1 + $0x78] sm:$0xff]
        %v347 = vld [vmem:[%s1 + $0x80] sm:$0xff]
        %v348 = vld [vmem:[%s1 + $0x88] sm:$0xff]
        %v349 = vld [vmem:[%s1 + $0x90] sm:$0xff]
        %v350 = vld [vmem:[%s1 + $0x98] sm:$0xff]
        %v351 = vld [vmem:[%s1 + $0xa0] sm:$0xff]
        %v352 = vld [vmem:[%s1 + $0xa8] sm:$0xff]
        %v353 = vld [vmem:[%s1 + $0xb0] sm:$0xff]
        %v354 = vld [vmem:[%s1 + $0xb8] sm:$0xff]
        %v355 = vld [vmem:[%s1 + $0xc0] sm:$0xff]
        %v356 = vld [vmem:[%s1 + $0xc8] sm:$0xff]
        %v357 = vld [vmem:[%s1 + $0xd0] sm:$0xff]
        %v358 = vld [vmem:[%s1 + $0xd8] sm:$0xff]
        %v359 = vld [vmem:[%s1 + $0xe0] sm:$0xff]
        %v360 = vld [vmem:[%s1 + $0xe8] sm:$0xff]
        %v361 = vld [vmem:[%s1 + $0xf0] sm:$0xff]
        %v362 = vld [vmem:[%s1 + $0xf8] sm:$0xff]
        %364 = vset.pattern.permute.xlu0 0
        %365 = vperm.xlu0 %364, %v331
        %v366 = vpop.permute.xlu0 %365
        %369 = vset.pattern.permute.xlu0 0
        %370 = vperm.xlu0 %369, %v332
        %v371 = vpop.permute.xlu0 %370
        %374 = vset.pattern.permute.xlu0 0
        %375 = vperm.xlu0 %374, %v333
        %v376 = vpop.permute.xlu0 %375
        %379 = vset.pattern.permute.xlu0 0
        %380 = vperm.xlu0 %379, %v334
        %v381 = vpop.permute.xlu0 %380
        %384 = vset.pattern.permute.xlu0 0
        %385 = vperm.xlu0 %384, %v335
        %v386 = vpop.permute.xlu0 %385
        %389 = vset.pattern.permute.xlu0 0
        %390 = vperm.xlu0 %389, %v336
        %v391 = vpop.permute.xlu0 %390
        %394 = vset.pattern.permute.xlu0 0
        %395 = vperm.xlu0 %394, %v337
        %v396 = vpop.permute.xlu0 %395
        %399 = vset.pattern.permute.xlu0 0
        %400 = vperm.xlu0 %399, %v338
        %v401 = vpop.permute.xlu0 %400
        %404 = vset.pattern.permute.xlu0 0
        %405 = vperm.xlu0 %404, %v339
        %v406 = vpop.permute.xlu0 %405
        %409 = vset.pattern.permute.xlu0 0
        %410 = vperm.xlu0 %409, %v340
        %v411 = vpop.permute.xlu0 %410
        %414 = vset.pattern.permute.xlu0 0
        %415 = vperm.xlu0 %414, %v341
        %v416 = vpop.permute.xlu0 %415
        %419 = vset.pattern.permute.xlu0 0
        %420 = vperm.xlu0 %419, %v342
        %v421 = vpop.permute.xlu0 %420
        %424 = vset.pattern.permute.xlu0 0
        %425 = vperm.xlu0 %424, %v343
        %v426 = vpop.permute.xlu0 %425
        %429 = vset.pattern.permute.xlu0 0
        %430 = vperm.xlu0 %429, %v344
        %v431 = vpop.permute.xlu0 %430
        %434 = vset.pattern.permute.xlu0 0
        %435 = vperm.xlu0 %434, %v345
        %v436 = vpop.permute.xlu0 %435
        %439 = vset.pattern.permute.xlu0 0
        %440 = vperm.xlu0 %439, %v346
        %v441 = vpop.permute.xlu0 %440
        %444 = vset.pattern.permute.xlu0 0
        %445 = vperm.xlu0 %444, %v347
        %v446 = vpop.permute.xlu0 %445
        %449 = vset.pattern.permute.xlu0 0
        %450 = vperm.xlu0 %449, %v348
        %v451 = vpop.permute.xlu0 %450
        %454 = vset.pattern.permute.xlu0 0
        %455 = vperm.xlu0 %454, %v349
        %v456 = vpop.permute.xlu0 %455
        %459 = vset.pattern.permute.xlu0 0
        %460 = vperm.xlu0 %459, %v350
        %v461 = vpop.permute.xlu0 %460
        %464 = vset.pattern.permute.xlu0 0
        %465 = vperm.xlu0 %464, %v351
        %v466 = vpop.permute.xlu0 %465
        %469 = vset.pattern.permute.xlu0 0
        %470 = vperm.xlu0 %469, %v352
        %v471 = vpop.permute.xlu0 %470
        %474 = vset.pattern.permute.xlu0 0
        %475 = vperm.xlu0 %474, %v353
        %v476 = vpop.permute.xlu0 %475
        %479 = vset.pattern.permute.xlu0 0
        %480 = vperm.xlu0 %479, %v354
        %v481 = vpop.permute.xlu0 %480
        %484 = vset.pattern.permute.xlu0 0
        %485 = vperm.xlu0 %484, %v355
        %v486 = vpop.permute.xlu0 %485
        %489 = vset.pattern.permute.xlu0 0
        %490 = vperm.xlu0 %489, %v356
        %v491 = vpop.permute.xlu0 %490
        %494 = vset.pattern.permute.xlu0 0
        %495 = vperm.xlu0 %494, %v357
        %v496 = vpop.permute.xlu0 %495
        %499 = vset.pattern.permute.xlu0 0
        %500 = vperm.xlu0 %499, %v358
        %v501 = vpop.permute.xlu0 %500
        %504 = vset.pattern.permute.xlu0 0
        %505 = vperm.xlu0 %504, %v359
        %v506 = vpop.permute.xlu0 %505
        %509 = vset.pattern.permute.xlu0 0
        %510 = vperm.xlu0 %509, %v360
        %v511 = vpop.permute.xlu0 %510
        %514 = vset.pattern.permute.xlu0 0
        %515 = vperm.xlu0 %514, %v361
        %v516 = vpop.permute.xlu0 %515
        %519 = vset.pattern.permute.xlu0 0
        %520 = vperm.xlu0 %519, %v362
        %v521 = vpop.permute.xlu0 %520
        %v523 = vlaneseq
        %v524 = vshrl.u32 %v523, 7
        %v525 = vsub.s32 0, %v524
        %v526 = vrot.slane %v330, %v525
        %v527 = vmul.f32 %v366, %v526
        %v528 = vmul.f32 %v371, %v526
        %v529 = vmul.f32 %v376, %v526
        %v530 = vmul.f32 %v381, %v526
        %v531 = vmul.f32 %v386, %v526
        %v532 = vmul.f32 %v391, %v526
        %v533 = vmul.f32 %v396, %v526
        %v534 = vmul.f32 %v401, %v526
        %v535 = vmul.f32 %v406, %v526
        %v536 = vmul.f32 %v411, %v526
        %v537 = vmul.f32 %v416, %v526
        %v538 = vmul.f32 %v421, %v526
        %v539 = vmul.f32 %v426, %v526
        %v540 = vmul.f32 %v431, %v526
        %v541 = vmul.f32 %v436, %v526
        %v542 = vmul.f32 %v441, %v526
        %v543 = vmul.f32 %v446, %v526
        %v544 = vmul.f32 %v451, %v526
        %v545 = vmul.f32 %v456, %v526
        %v546 = vmul.f32 %v461, %v526
        %v547 = vmul.f32 %v466, %v526
        %v548 = vmul.f32 %v471, %v526
        %v549 = vmul.f32 %v476, %v526
        %v550 = vmul.f32 %v481, %v526
        %v551 = vmul.f32 %v486, %v526
        %v552 = vmul.f32 %v491, %v526
        %v553 = vmul.f32 %v496, %v526
        %v554 = vmul.f32 %v501, %v526
        %v555 = vmul.f32 %v506, %v526
        %v556 = vmul.f32 %v511, %v526
        %v557 = vmul.f32 %v516, %v526
        %v558 = vmul.f32 %v521, %v526
        %559 = vset.pattern.permute.xlu0 1
        %560 = vperm.xlu0 %559, %v331
        %v561 = vpop.permute.xlu0 %560
        %563 = vset.pattern.permute.xlu0 1
        %564 = vperm.xlu0 %563, %v332
        %v565 = vpop.permute.xlu0 %564
        %567 = vset.pattern.permute.xlu0 1
        %568 = vperm.xlu0 %567, %v333
        %v569 = vpop.permute.xlu0 %568
        %571 = vset.pattern.permute.xlu0 1
        %572 = vperm.xlu0 %571, %v334
        %v573 = vpop.permute.xlu0 %572
        %575 = vset.pattern.permute.xlu0 1
        %576 = vperm.xlu0 %575, %v335
        %v577 = vpop.permute.xlu0 %576
        %579 = vset.pattern.permute.xlu0 1
        %580 = vperm.xlu0 %579, %v336
        %v581 = vpop.permute.xlu0 %580
        %583 = vset.pattern.permute.xlu0 1
        %584 = vperm.xlu0 %583, %v337
        %v585 = vpop.permute.xlu0 %584
        %587 = vset.pattern.permute.xlu0 1
        %588 = vperm.xlu0 %587, %v338
        %v589 = vpop.permute.xlu0 %588
        %591 = vset.pattern.permute.xlu0 1
        %592 = vperm.xlu0 %591, %v339
        %v593 = vpop.permute.xlu0 %592
        %595 = vset.pattern.permute.xlu0 1
        %596 = vperm.xlu0 %595, %v340
        %v597 = vpop.permute.xlu0 %596
        %599 = vset.pattern.permute.xlu0 1
        %600 = vperm.xlu0 %599, %v341
        %v601 = vpop.permute.xlu0 %600
        %603 = vset.pattern.permute.xlu0 1
        %604 = vperm.xlu0 %603, %v342
        %v605 = vpop.permute.xlu0 %604
        %607 = vset.pattern.permute.xlu0 1
        %608 = vperm.xlu0 %607, %v343
        %v609 = vpop.permute.xlu0 %608
        %611 = vset.pattern.permute.xlu0 1
        %612 = vperm.xlu0 %611, %v344
        %v613 = vpop.permute.xlu0 %612
        %615 = vset.pattern.permute.xlu0 1
        %616 = vperm.xlu0 %615, %v345
        %v617 = vpop.permute.xlu0 %616
        %619 = vset.pattern.permute.xlu0 1
        %620 = vperm.xlu0 %619, %v346
        %v621 = vpop.permute.xlu0 %620
        %623 = vset.pattern.permute.xlu0 1
        %624 = vperm.xlu0 %623, %v347
        %v625 = vpop.permute.xlu0 %624
        %627 = vset.pattern.permute.xlu0 1
        %628 = vperm.xlu0 %627, %v348
        %v629 = vpop.permute.xlu0 %628
        %631 = vset.pattern.permute.xlu0 1
        %632 = vperm.xlu0 %631, %v349
        %v633 = vpop.permute.xlu0 %632
        %635 = vset.pattern.permute.xlu0 1
        %636 = vperm.xlu0 %635, %v350
        %v637 = vpop.permute.xlu0 %636
        %639 = vset.pattern.permute.xlu0 1
        %640 = vperm.xlu0 %639, %v351
        %v641 = vpop.permute.xlu0 %640
        %643 = vset.pattern.permute.xlu0 1
        %644 = vperm.xlu0 %643, %v352
        %v645 = vpop.permute.xlu0 %644
        %647 = vset.pattern.permute.xlu0 1
        %648 = vperm.xlu0 %647, %v353
        %v649 = vpop.permute.xlu0 %648
        %651 = vset.pattern.permute.xlu0 1
        %652 = vperm.xlu0 %651, %v354
        %v653 = vpop.permute.xlu0 %652
        %655 = vset.pattern.permute.xlu0 1
        %656 = vperm.xlu0 %655, %v355
        %v657 = vpop.permute.xlu0 %656
        %659 = vset.pattern.permute.xlu0 1
        %660 = vperm.xlu0 %659, %v356
        %v661 = vpop.permute.xlu0 %660
        %663 = vset.pattern.permute.xlu0 1
        %664 = vperm.xlu0 %663, %v357
        %v665 = vpop.permute.xlu0 %664
        %667 = vset.pattern.permute.xlu0 1
        %668 = vperm.xlu0 %667, %v358
        %v669 = vpop.permute.xlu0 %668
        %671 = vset.pattern.permute.xlu0 1
        %672 = vperm.xlu0 %671, %v359
        %v673 = vpop.permute.xlu0 %672
        %675 = vset.pattern.permute.xlu0 1
        %676 = vperm.xlu0 %675, %v360
        %v677 = vpop.permute.xlu0 %676
        %679 = vset.pattern.permute.xlu0 1
        %680 = vperm.xlu0 %679, %v361
        %v681 = vpop.permute.xlu0 %680
        %683 = vset.pattern.permute.xlu0 1
        %684 = vperm.xlu0 %683, %v362
        %v685 = vpop.permute.xlu0 %684
        %v687 = vlaneseq
        %v688 = vshrl.u32 %v687, 7
        %v689 = vsub.s32 1, %v688
        %v690 = vrot.slane %v330, %v689
        %v691 = vmul.f32 %v561, %v690
        %v692 = vmul.f32 %v565, %v690
        %v693 = vmul.f32 %v569, %v690
        %v694 = vmul.f32 %v573, %v690
        %v695 = vmul.f32 %v577, %v690
        %v696 = vmul.f32 %v581, %v690
        %v697 = vmul.f32 %v585, %v690
        %v698 = vmul.f32 %v589, %v690
        %v699 = vmul.f32 %v593, %v690
        %v700 = vmul.f32 %v597, %v690
        %v701 = vmul.f32 %v601, %v690
        %v702 = vmul.f32 %v605, %v690
        %v703 = vmul.f32 %v609, %v690
        %v704 = vmul.f32 %v613, %v690
        %v705 = vmul.f32 %v617, %v690
        %v706 = vmul.f32 %v621, %v690
        %v707 = vmul.f32 %v625, %v690
        %v708 = vmul.f32 %v629, %v690
        %v709 = vmul.f32 %v633, %v690
        %v710 = vmul.f32 %v637, %v690
        %v711 = vmul.f32 %v641, %v690
        %v712 = vmul.f32 %v645, %v690
        %v713 = vmul.f32 %v649, %v690
        %v714 = vmul.f32 %v653, %v690
        %v715 = vmul.f32 %v657, %v690
        %v716 = vmul.f32 %v661, %v690
        %v717 = vmul.f32 %v665, %v690
        %v718 = vmul.f32 %v669, %v690
        %v719 = vmul.f32 %v673, %v690
        %v720 = vmul.f32 %v677, %v690
        %v721 = vmul.f32 %v681, %v690
        %v722 = vmul.f32 %v685, %v690
        %v723 = vadd.f32 %v527, %v691
        %v724 = vadd.f32 %v528, %v692
        %v725 = vadd.f32 %v529, %v693
        %v726 = vadd.f32 %v530, %v694
        %v727 = vadd.f32 %v531, %v695
        %v728 = vadd.f32 %v532, %v696
        %v729 = vadd.f32 %v533, %v697
        %v730 = vadd.f32 %v534, %v698
        %v731 = vadd.f32 %v535, %v699
        %v732 = vadd.f32 %v536, %v700
        %v733 = vadd.f32 %v537, %v701
        %v734 = vadd.f32 %v538, %v702
        %v735 = vadd.f32 %v539, %v703
        %v736 = vadd.f32 %v540, %v704
        %v737 = vadd.f32 %v541, %v705
        %v738 = vadd.f32 %v542, %v706
        %v739 = vadd.f32 %v543, %v707
        %v740 = vadd.f32 %v544, %v708
        %v741 = vadd.f32 %v545, %v709
        %v742 = vadd.f32 %v546, %v710
        %v743 = vadd.f32 %v547, %v711
        %v744 = vadd.f32 %v548, %v712
        %v745 = vadd.f32 %v549, %v713
        %v746 = vadd.f32 %v550, %v714
        %v747 = vadd.f32 %v551, %v715
        %v748 = vadd.f32 %v552, %v716
        %v749 = vadd.f32 %v553, %v717
        %v750 = vadd.f32 %v554, %v718
        %v751 = vadd.f32 %v555, %v719
        %v752 = vadd.f32 %v556, %v720
        %v753 = vadd.f32 %v557, %v721
        %v754 = vadd.f32 %v558, %v722
        %v755 = vld [vmem:[%s2] sm:$0xff]
        %v756 = vld [vmem:[%s2 + $0x8] sm:$0xff]
        %v757 = vld [vmem:[%s2 + $0x10] sm:$0xff]
        %v758 = vld [vmem:[%s2 + $0x18] sm:$0xff]
        %v759 = vld [vmem:[%s2 + $0x20] sm:$0xff]
        %v760 = vld [vmem:[%s2 + $0x28] sm:$0xff]
        %v761 = vld [vmem:[%s2 + $0x30] sm:$0xff]
        %v762 = vld [vmem:[%s2 + $0x38] sm:$0xff]
        %v763 = vld [vmem:[%s2 + $0x40] sm:$0xff]
        %v764 = vld [vmem:[%s2 + $0x48] sm:$0xff]
        %v765 = vld [vmem:[%s2 + $0x50] sm:$0xff]
        %v766 = vld [vmem:[%s2 + $0x58] sm:$0xff]
        %v767 = vld [vmem:[%s2 + $0x60] sm:$0xff]
        %v768 = vld [vmem:[%s2 + $0x68] sm:$0xff]
        %v769 = vld [vmem:[%s2 + $0x70] sm:$0xff]
        %v770 = vld [vmem:[%s2 + $0x78] sm:$0xff]
        %v771 = vld [vmem:[%s2 + $0x80] sm:$0xff]
        %v772 = vld [vmem:[%s2 + $0x88] sm:$0xff]
        %v773 = vld [vmem:[%s2 + $0x90] sm:$0xff]
        %v774 = vld [vmem:[%s2 + $0x98] sm:$0xff]
        %v775 = vld [vmem:[%s2 + $0xa0] sm:$0xff]
        %v776 = vld [vmem:[%s2 + $0xa8] sm:$0xff]
        %v777 = vld [vmem:[%s2 + $0xb0] sm:$0xff]
        %v778 = vld [vmem:[%s2 + $0xb8] sm:$0xff]
        %v779 = vld [vmem:[%s2 + $0xc0] sm:$0xff]
        %v780 = vld [vmem:[%s2 + $0xc8] sm:$0xff]
        %v781 = vld [vmem:[%s2 + $0xd0] sm:$0xff]
        %v782 = vld [vmem:[%s2 + $0xd8] sm:$0xff]
        %v783 = vld [vmem:[%s2 + $0xe0] sm:$0xff]
        %v784 = vld [vmem:[%s2 + $0xe8] sm:$0xff]
        %v785 = vld [vmem:[%s2 + $0xf0] sm:$0xff]
        %v786 = vld [vmem:[%s2 + $0xf8] sm:$0xff]
        %788 = vset.pattern.permute.xlu0 0
        %789 = vperm.xlu0 %788, %v755
        %v790 = vpop.permute.xlu0 %789
        %793 = vset.pattern.permute.xlu0 0
        %794 = vperm.xlu0 %793, %v756
        %v795 = vpop.permute.xlu0 %794
        %798 = vset.pattern.permute.xlu0 0
        %799 = vperm.xlu0 %798, %v757
        %v800 = vpop.permute.xlu0 %799
        %803 = vset.pattern.permute.xlu0 0
        %804 = vperm.xlu0 %803, %v758
        %v805 = vpop.permute.xlu0 %804
        %808 = vset.pattern.permute.xlu0 0
        %809 = vperm.xlu0 %808, %v759
        %v810 = vpop.permute.xlu0 %809
        %813 = vset.pattern.permute.xlu0 0
        %814 = vperm.xlu0 %813, %v760
        %v815 = vpop.permute.xlu0 %814
        %818 = vset.pattern.permute.xlu0 0
        %819 = vperm.xlu0 %818, %v761
        %v820 = vpop.permute.xlu0 %819
        %823 = vset.pattern.permute.xlu0 0
        %824 = vperm.xlu0 %823, %v762
        %v825 = vpop.permute.xlu0 %824
        %828 = vset.pattern.permute.xlu0 0
        %829 = vperm.xlu0 %828, %v763
        %v830 = vpop.permute.xlu0 %829
        %833 = vset.pattern.permute.xlu0 0
        %834 = vperm.xlu0 %833, %v764
        %v835 = vpop.permute.xlu0 %834
        %838 = vset.pattern.permute.xlu0 0
        %839 = vperm.xlu0 %838, %v765
        %v840 = vpop.permute.xlu0 %839
        %843 = vset.pattern.permute.xlu0 0
        %844 = vperm.xlu0 %843, %v766
        %v845 = vpop.permute.xlu0 %844
        %848 = vset.pattern.permute.xlu0 0
        %849 = vperm.xlu0 %848, %v767
        %v850 = vpop.permute.xlu0 %849
        %853 = vset.pattern.permute.xlu0 0
        %854 = vperm.xlu0 %853, %v768
        %v855 = vpop.permute.xlu0 %854
        %858 = vset.pattern.permute.xlu0 0
        %859 = vperm.xlu0 %858, %v769
        %v860 = vpop.permute.xlu0 %859
        %863 = vset.pattern.permute.xlu0 0
        %864 = vperm.xlu0 %863, %v770
        %v865 = vpop.permute.xlu0 %864
        %868 = vset.pattern.permute.xlu0 0
        %869 = vperm.xlu0 %868, %v771
        %v870 = vpop.permute.xlu0 %869
        %873 = vset.pattern.permute.xlu0 0
        %874 = vperm.xlu0 %873, %v772
        %v875 = vpop.permute.xlu0 %874
        %878 = vset.pattern.permute.xlu0 0
        %879 = vperm.xlu0 %878, %v773
        %v880 = vpop.permute.xlu0 %879
        %883 = vset.pattern.permute.xlu0 0
        %884 = vperm.xlu0 %883, %v774
        %v885 = vpop.permute.xlu0 %884
        %888 = vset.pattern.permute.xlu0 0
        %889 = vperm.xlu0 %888, %v775
        %v890 = vpop.permute.xlu0 %889
        %893 = vset.pattern.permute.xlu0 0
        %894 = vperm.xlu0 %893, %v776
        %v895 = vpop.permute.xlu0 %894
        %898 = vset.pattern.permute.xlu0 0
        %899 = vperm.xlu0 %898, %v777
        %v900 = vpop.permute.xlu0 %899
        %903 = vset.pattern.permute.xlu0 0
        %904 = vperm.xlu0 %903, %v778
        %v905 = vpop.permute.xlu0 %904
        %908 = vset.pattern.permute.xlu0 0
        %909 = vperm.xlu0 %908, %v779
        %v910 = vpop.permute.xlu0 %909
        %913 = vset.pattern.permute.xlu0 0
        %914 = vperm.xlu0 %913, %v780
        %v915 = vpop.permute.xlu0 %914
        %918 = vset.pattern.permute.xlu0 0
        %919 = vperm.xlu0 %918, %v781
        %v920 = vpop.permute.xlu0 %919
        %923 = vset.pattern.permute.xlu0 0
        %924 = vperm.xlu0 %923, %v782
        %v925 = vpop.permute.xlu0 %924
        %928 = vset.pattern.permute.xlu0 0
        %929 = vperm.xlu0 %928, %v783
        %v930 = vpop.permute.xlu0 %929
        %933 = vset.pattern.permute.xlu0 0
        %934 = vperm.xlu0 %933, %v784
        %v935 = vpop.permute.xlu0 %934
        %938 = vset.pattern.permute.xlu0 0
        %939 = vperm.xlu0 %938, %v785
        %v940 = vpop.permute.xlu0 %939
        %943 = vset.pattern.permute.xlu0 0
        %944 = vperm.xlu0 %943, %v786
        %v945 = vpop.permute.xlu0 %944
        %v947 = vadd.f32 %v723, %v790
        %v948 = vadd.f32 %v724, %v795
        %v949 = vadd.f32 %v725, %v800
        %v950 = vadd.f32 %v726, %v805
        %v951 = vadd.f32 %v727, %v810
        %v952 = vadd.f32 %v728, %v815
        %v953 = vadd.f32 %v729, %v820
        %v954 = vadd.f32 %v730, %v825
        %v955 = vadd.f32 %v731, %v830
        %v956 = vadd.f32 %v732, %v835
        %v957 = vadd.f32 %v733, %v840
        %v958 = vadd.f32 %v734, %v845
        %v959 = vadd.f32 %v735, %v850
        %v960 = vadd.f32 %v736, %v855
        %v961 = vadd.f32 %v737, %v860
        %v962 = vadd.f32 %v738, %v865
        %v963 = vadd.f32 %v739, %v870
        %v964 = vadd.f32 %v740, %v875
        %v965 = vadd.f32 %v741, %v880
        %v966 = vadd.f32 %v742, %v885
        %v967 = vadd.f32 %v743, %v890
        %v968 = vadd.f32 %v744, %v895
        %v969 = vadd.f32 %v745, %v900
        %v970 = vadd.f32 %v746, %v905
        %v971 = vadd.f32 %v747, %v910
        %v972 = vadd.f32 %v748, %v915
        %v973 = vadd.f32 %v749, %v920
        %v974 = vadd.f32 %v750, %v925
        %v975 = vadd.f32 %v751, %v930
        %v976 = vadd.f32 %v752, %v935
        %v977 = vadd.f32 %v753, %v940
        %v978 = vadd.f32 %v754, %v945
        %v979 = vmax.f32 %v947, 0.0
        %v980 = vmax.f32 %v948, 0.0
        %v981 = vmax.f32 %v949, 0.0
        %v982 = vmax.f32 %v950, 0.0
        %v983 = vmax.f32 %v951, 0.0
        %v984 = vmax.f32 %v952, 0.0
        %v985 = vmax.f32 %v953, 0.0
        %v986 = vmax.f32 %v954, 0.0
        %v987 = vmax.f32 %v955, 0.0
        %v988 = vmax.f32 %v956, 0.0
        %v989 = vmax.f32 %v957, 0.0
        %v990 = vmax.f32 %v958, 0.0
        %v991 = vmax.f32 %v959, 0.0
        %v992 = vmax.f32 %v960, 0.0
        %v993 = vmax.f32 %v961, 0.0
        %v994 = vmax.f32 %v962, 0.0
        %v995 = vmax.f32 %v963, 0.0
        %v996 = vmax.f32 %v964, 0.0
        %v997 = vmax.f32 %v965, 0.0
        %v998 = vmax.f32 %v966, 0.0
        %v999 = vmax.f32 %v967, 0.0
        %v1000 = vmax.f32 %v968, 0.0
        %v1001 = vmax.f32 %v969, 0.0
        %v1002 = vmax.f32 %v970, 0.0
        %v1003 = vmax.f32 %v971, 0.0
        %v1004 = vmax.f32 %v972, 0.0
        %v1005 = vmax.f32 %v973, 0.0
        %v1006 = vmax.f32 %v974, 0.0
        %v1007 = vmax.f32 %v975, 0.0
        %v1008 = vmax.f32 %v976, 0.0
        %v1009 = vmax.f32 %v977, 0.0
        %v1010 = vmax.f32 %v978, 0.0
        %v1011 = vld [vmem:[%s3] sm:$0xff]
        %v1012 = vld [vmem:[%s3 + $0x8] sm:$0xff]
        %v1013 = vld [vmem:[%s3 + $0x10] sm:$0xff]
        %v1014 = vld [vmem:[%s3 + $0x18] sm:$0xff]
        %v1015 = vld [vmem:[%s3 + $0x20] sm:$0xff]
        %v1016 = vld [vmem:[%s3 + $0x28] sm:$0xff]
        %v1017 = vld [vmem:[%s3 + $0x30] sm:$0xff]
        %v1018 = vld [vmem:[%s3 + $0x38] sm:$0xff]
        %v1019 = vld [vmem:[%s3 + $0x40] sm:$0xff]
        %v1020 = vld [vmem:[%s3 + $0x48] sm:$0xff]
        %v1021 = vld [vmem:[%s3 + $0x50] sm:$0xff]
        %v1022 = vld [vmem:[%s3 + $0x58] sm:$0xff]
        %v1023 = vld [vmem:[%s3 + $0x60] sm:$0xff]
        %v1024 = vld [vmem:[%s3 + $0x68] sm:$0xff]
        %v1025 = vld [vmem:[%s3 + $0x70] sm:$0xff]
        %v1026 = vld [vmem:[%s3 + $0x78] sm:$0xff]
        %v1027 = vpack.c.bf16 %v980, %v979
        %v1028 = vpack.c.bf16 %v982, %v981
        %v1029 = vpack.c.bf16 %v984, %v983
        %v1030 = vpack.c.bf16 %v986, %v985
        %v1031 = vpack.c.bf16 %v988, %v987
        %v1032 = vpack.c.bf16 %v990, %v989
        %v1033 = vpack.c.bf16 %v992, %v991
        %v1034 = vpack.c.bf16 %v994, %v993
        %v1035 = vpack.c.bf16 %v996, %v995
        %v1036 = vpack.c.bf16 %v998, %v997
        %v1037 = vpack.c.bf16 %v1000, %v999
        %v1038 = vpack.c.bf16 %v1002, %v1001
        %v1039 = vpack.c.bf16 %v1004, %v1003
        %v1040 = vpack.c.bf16 %v1006, %v1005
        %v1041 = vpack.c.bf16 %v1008, %v1007
        %v1042 = vpack.c.bf16 %v1010, %v1009
        %v1043 = vld [vmem:[%s4] sm:$0xff]
        %v1044 = vld [vmem:[%s4 + $0x8] sm:$0xff]
        %v1045 = vld [vmem:[%s4 + $0x10] sm:$0xff]
        %v1046 = vld [vmem:[%s4 + $0x18] sm:$0xff]
        %v1047 = vld [vmem:[%s4 + $0x20] sm:$0xff]
        %v1048 = vld [vmem:[%s4 + $0x28] sm:$0xff]
        %v1049 = vld [vmem:[%s4 + $0x30] sm:$0xff]
        %v1050 = vld [vmem:[%s4 + $0x38] sm:$0xff]
        %v1051 = vld [vmem:[%s4 + $0x40] sm:$0xff]
        %v1052 = vld [vmem:[%s4 + $0x48] sm:$0xff]
        %v1053 = vld [vmem:[%s4 + $0x50] sm:$0xff]
        %v1054 = vld [vmem:[%s4 + $0x58] sm:$0xff]
        %v1055 = vld [vmem:[%s4 + $0x60] sm:$0xff]
        %v1056 = vld [vmem:[%s4 + $0x68] sm:$0xff]
        %v1057 = vld [vmem:[%s4 + $0x70] sm:$0xff]
        %v1058 = vld [vmem:[%s4 + $0x78] sm:$0xff]
        %1060 = vset.pattern.permute.xlu0 0
        %1061 = vperm.xlu0 %1060, %v1043
        %v1062 = vpop.permute.xlu0 %1061
        %1065 = vset.pattern.permute.xlu0 0
        %1066 = vperm.xlu0 %1065, %v1044
        %v1067 = vpop.permute.xlu0 %1066
        %1070 = vset.pattern.permute.xlu0 0
        %1071 = vperm.xlu0 %1070, %v1045
        %v1072 = vpop.permute.xlu0 %1071
        %1075 = vset.pattern.permute.xlu0 0
        %1076 = vperm.xlu0 %1075, %v1046
        %v1077 = vpop.permute.xlu0 %1076
        %1080 = vset.pattern.permute.xlu0 0
        %1081 = vperm.xlu0 %1080, %v1047
        %v1082 = vpop.permute.xlu0 %1081
        %1085 = vset.pattern.permute.xlu0 0
        %1086 = vperm.xlu0 %1085, %v1048
        %v1087 = vpop.permute.xlu0 %1086
        %1090 = vset.pattern.permute.xlu0 0
        %1091 = vperm.xlu0 %1090, %v1049
        %v1092 = vpop.permute.xlu0 %1091
        %1095 = vset.pattern.permute.xlu0 0
        %1096 = vperm.xlu0 %1095, %v1050
        %v1097 = vpop.permute.xlu0 %1096
        %1100 = vset.pattern.permute.xlu0 0
        %1101 = vperm.xlu0 %1100, %v1051
        %v1102 = vpop.permute.xlu0 %1101
        %1105 = vset.pattern.permute.xlu0 0
        %1106 = vperm.xlu0 %1105, %v1052
        %v1107 = vpop.permute.xlu0 %1106
        %1110 = vset.pattern.permute.xlu0 0
        %1111 = vperm.xlu0 %1110, %v1053
        %v1112 = vpop.permute.xlu0 %1111
        %1115 = vset.pattern.permute.xlu0 0
        %1116 = vperm.xlu0 %1115, %v1054
        %v1117 = vpop.permute.xlu0 %1116
        %1120 = vset.pattern.permute.xlu0 0
        %1121 = vperm.xlu0 %1120, %v1055
        %v1122 = vpop.permute.xlu0 %1121
        %1125 = vset.pattern.permute.xlu0 0
        %1126 = vperm.xlu0 %1125, %v1056
        %v1127 = vpop.permute.xlu0 %1126
        %1130 = vset.pattern.permute.xlu0 0
        %1131 = vperm.xlu0 %1130, %v1057
        %v1132 = vpop.permute.xlu0 %1131
        %1135 = vset.pattern.permute.xlu0 0
        %1136 = vperm.xlu0 %1135, %v1058
        %v1137 = vpop.permute.xlu0 %1136
        %v1155 = vunpack.c.l.b16 %v1011
        %v1156 = vunpack.c.h.b16 %v1011
        %v1157 = vunpack.c.l.b16 %v1012
        %v1158 = vunpack.c.h.b16 %v1012
        %v1159 = vunpack.c.l.b16 %v1013
        %v1160 = vunpack.c.h.b16 %v1013
        %v1161 = vunpack.c.l.b16 %v1014
        %v1162 = vunpack.c.h.b16 %v1014
        %v1163 = vunpack.c.l.b16 %v1015
        %v1164 = vunpack.c.h.b16 %v1015
        %v1165 = vunpack.c.l.b16 %v1016
        %v1166 = vunpack.c.h.b16 %v1016
        %v1167 = vunpack.c.l.b16 %v1017
        %v1168 = vunpack.c.h.b16 %v1017
        %v1169 = vunpack.c.l.b16 %v1018
        %v1170 = vunpack.c.h.b16 %v1018
        %v1171 = vunpack.c.l.b16 %v1019
        %v1172 = vunpack.c.h.b16 %v1019
        %v1173 = vunpack.c.l.b16 %v1020
        %v1174 = vunpack.c.h.b16 %v1020
        %v1175 = vunpack.c.l.b16 %v1021
        %v1176 = vunpack.c.h.b16 %v1021
        %v1177 = vunpack.c.l.b16 %v1022
        %v1178 = vunpack.c.h.b16 %v1022
        %v1179 = vunpack.c.l.b16 %v1023
        %v1180 = vunpack.c.h.b16 %v1023
        %v1181 = vunpack.c.l.b16 %v1024
        %v1182 = vunpack.c.h.b16 %v1024
        %v1183 = vunpack.c.l.b16 %v1025
        %v1184 = vunpack.c.h.b16 %v1025
        %v1185 = vunpack.c.l.b16 %v1026
        %v1186 = vunpack.c.h.b16 %v1026
        %v1187 = vpack.c.b16 %v1157, %v1155
        %v1188 = vpack.c.b16 %v1158, %v1156
        %v1189 = vpack.c.b16 %v1161, %v1159
        %v1190 = vpack.c.b16 %v1162, %v1160
        %v1191 = vpack.c.b16 %v1165, %v1163
        %v1192 = vpack.c.b16 %v1166, %v1164
        %v1193 = vpack.c.b16 %v1169, %v1167
        %v1194 = vpack.c.b16 %v1170, %v1168
        %v1195 = vpack.c.b16 %v1173, %v1171
        %v1196 = vpack.c.b16 %v1174, %v1172
        %v1197 = vpack.c.b16 %v1177, %v1175
        %v1198 = vpack.c.b16 %v1178, %v1176
        %v1199 = vpack.c.b16 %v1181, %v1179
        %v1200 = vpack.c.b16 %v1182, %v1180
        %v1201 = vpack.c.b16 %v1185, %v1183
        %v1202 = vpack.c.b16 %v1186, %v1184
        %1219 = vmatprep.subr.bf16.mxu0 0
        %1220 = vmatpush1.bf16.msra.mxu0 %v1027
        %1221 = vmatprep.subr.bf16.mxu0 0
        %1222 = vmatpush1.bf16.msra.mxu0 %v1028
        %1223 = vmatprep.subr.bf16.mxu0 0
        %1224 = vmatpush1.bf16.msra.mxu0 %v1029
        %1225 = vmatprep.subr.bf16.mxu0 0
        %1226 = vmatpush1.bf16.msra.mxu0 %v1030
        %1227 = vmatprep.subr.bf16.mxu0 0
        %1228 = vmatpush1.bf16.msra.mxu0 %v1031
        %1229 = vmatprep.subr.bf16.mxu0 0
        %1230 = vmatpush1.bf16.msra.mxu0 %v1032
        %1231 = vmatprep.subr.bf16.mxu0 0
        %1232 = vmatpush1.bf16.msra.mxu0 %v1033
        %1233 = vmatprep.subr.bf16.mxu0 0
        %1234 = vmatpush1.bf16.msra.mxu0 %v1034
        %1235 = vmatprep.subr.bf16.mxu0 0
        %1236 = vmatpush1.bf16.msra.mxu0 %v1035
        %1237 = vmatprep.subr.bf16.mxu0 0
        %1238 = vmatpush1.bf16.msra.mxu0 %v1036
        %1239 = vmatprep.subr.bf16.mxu0 0
        %1240 = vmatpush1.bf16.msra.mxu0 %v1037
        %1241 = vmatprep.subr.bf16.mxu0 0
        %1242 = vmatpush1.bf16.msra.mxu0 %v1038
        %1243 = vmatprep.subr.bf16.mxu0 0
        %1244 = vmatpush1.bf16.msra.mxu0 %v1039
        %1245 = vmatprep.subr.bf16.mxu0 0
        %1246 = vmatpush1.bf16.msra.mxu0 %v1040
        %1247 = vmatprep.subr.bf16.mxu0 0
        %1248 = vmatpush1.bf16.msra.mxu0 %v1041
        %1249 = vmatprep.subr.bf16.mxu0 0
        %1250 = vmatpush1.bf16.msra.mxu0 %v1042
        %1251 = vmatprep.mubr.bf16.mxu0 %v1188
        %1252 = vmatmul.mubr.bf16.gmra.mrb[0].mxu0 %v1187
        %v1253 = vpop.f32.mrb[0].mxu0
        %v1254 = vadd.f32 %v1062, %v1253
        %v1255 = vpop.f32.mrb[0].mxu0
        %v1256 = vpop.f32.mrb[0].mxu0
        %v1257 = vadd.f32 %v1067, %v1256
        %v1258 = vpop.f32.mrb[0].mxu0
        %1259 = vmatprep.mubr.bf16.mxu0 %v1190
        %1260 = vmatmul.mubr.bf16.gmra.mrb[0].mxu0 %v1189
        %v1261 = vpop.f32.mrb[0].mxu0
        %v1262 = vadd.f32 %v1072, %v1261
        %v1263 = vpop.f32.mrb[0].mxu0
        %v1264 = vpop.f32.mrb[0].mxu0
        %v1265 = vadd.f32 %v1077, %v1264
        %v1266 = vpop.f32.mrb[0].mxu0
        %1267 = vmatprep.mubr.bf16.mxu0 %v1192
        %1268 = vmatmul.mubr.bf16.gmra.mrb[0].mxu0 %v1191
        %v1269 = vpop.f32.mrb[0].mxu0
        %v1270 = vadd.f32 %v1082, %v1269
        %v1271 = vpop.f32.mrb[0].mxu0
        %v1272 = vpop.f32.mrb[0].mxu0
        %v1273 = vadd.f32 %v1087, %v1272
        %v1274 = vpop.f32.mrb[0].mxu0
        %1275 = vmatprep.mubr.bf16.mxu0 %v1194
        %1276 = vmatmul.mubr.bf16.gmra.mrb[0].mxu0 %v1193
        %v1277 = vpop.f32.mrb[0].mxu0
        %v1278 = vadd.f32 %v1092, %v1277
        %v1279 = vpop.f32.mrb[0].mxu0
        %v1280 = vpop.f32.mrb[0].mxu0
        %v1281 = vadd.f32 %v1097, %v1280
        %v1282 = vpop.f32.mrb[0].mxu0
        %1283 = vmatprep.mubr.bf16.mxu0 %v1196
        %1284 = vmatmul.mubr.bf16.gmra.mrb[0].mxu0 %v1195
        %v1285 = vpop.f32.mrb[0].mxu0
        %v1286 = vadd.f32 %v1102, %v1285
        %v1287 = vpop.f32.mrb[0].mxu0
        %v1288 = vpop.f32.mrb[0].mxu0
        %v1289 = vadd.f32 %v1107, %v1288
        %v1290 = vpop.f32.mrb[0].mxu0
        %1291 = vmatprep.mubr.bf16.mxu0 %v1198
        %1292 = vmatmul.mubr.bf16.gmra.mrb[0].mxu0 %v1197
        %v1293 = vpop.f32.mrb[0].mxu0
        %v1294 = vadd.f32 %v1112, %v1293
        %v1295 = vpop.f32.mrb[0].mxu0
        %v1296 = vpop.f32.mrb[0].mxu0
        %v1297 = vadd.f32 %v1117, %v1296
        %v1298 = vpop.f32.mrb[0].mxu0
        %1299 = vmatprep.mubr.bf16.mxu0 %v1200
        %1300 = vmatmul.mubr.bf16.gmra.mrb[0].mxu0 %v1199
        %v1301 = vpop.f32.mrb[0].mxu0
        %v1302 = vadd.f32 %v1122, %v1301
        %v1303 = vpop.f32.mrb[0].mxu0
        %v1304 = vpop.f32.mrb[0].mxu0
        %v1305 = vadd.f32 %v1127, %v1304
        %v1306 = vpop.f32.mrb[0].mxu0
        %1307 = vmatprep.mubr.bf16.mxu0 %v1202
        %1308 = vmatmul.mubr.bf16.gmra.mrb[0].mxu0 %v1201
        %v1309 = vpop.f32.mrb[0].mxu0
        %v1310 = vadd.f32 %v1132, %v1309
        %v1311 = vpop.f32.mrb[0].mxu0
        %v1312 = vpop.f32.mrb[0].mxu0
        %v1313 = vadd.f32 %v1137, %v1312
        %v1314 = vpop.f32.mrb[0].mxu0
        %1315 = vdwg.mxu0
        %v1316 = vmax.f32 %v1254, 0.0
        %v1317 = vmax.f32 %v1257, 0.0
        %v1318 = vmax.f32 %v1262, 0.0
        %v1319 = vmax.f32 %v1265, 0.0
        %v1320 = vmax.f32 %v1270, 0.0
        %v1321 = vmax.f32 %v1273, 0.0
        %v1322 = vmax.f32 %v1278, 0.0
        %v1323 = vmax.f32 %v1281, 0.0
        %v1324 = vmax.f32 %v1286, 0.0
        %v1325 = vmax.f32 %v1289, 0.0
        %v1326 = vmax.f32 %v1294, 0.0
        %v1327 = vmax.f32 %v1297, 0.0
        %v1328 = vmax.f32 %v1302, 0.0
        %v1329 = vmax.f32 %v1305, 0.0
        %v1330 = vmax.f32 %v1310, 0.0
        %v1331 = vmax.f32 %v1313, 0.0
        %v1332 = vld [vmem:[%s5] sm:$0xf]
        %v1333 = vld [vmem:[%s5 + $0x4] sm:$0xf]
        %v1334 = vld [vmem:[%s5 + $0x8] sm:$0xf]
        %v1335 = vld [vmem:[%s5 + $0xc] sm:$0xf]
        %v1336 = vld [vmem:[%s5 + $0x10] sm:$0xf]
        %v1337 = vld [vmem:[%s5 + $0x14] sm:$0xf]
        %v1338 = vld [vmem:[%s5 + $0x18] sm:$0xf]
        %v1339 = vld [vmem:[%s5 + $0x1c] sm:$0xf]
        %v1340 = vpack.c.bf16 %v1317, %v1316
        %v1341 = vpack.c.bf16 %v1319, %v1318
        %v1342 = vpack.c.bf16 %v1321, %v1320
        %v1343 = vpack.c.bf16 %v1323, %v1322
        %v1344 = vpack.c.bf16 %v1325, %v1324
        %v1345 = vpack.c.bf16 %v1327, %v1326
        %v1346 = vpack.c.bf16 %v1329, %v1328
        %v1347 = vpack.c.bf16 %v1331, %v1330
        %v1348 = vld [vmem:[%s6] sm:$0xff]
        %v1349 = vld [vmem:[%s6 + $0x8] sm:$0xff]
        %v1350 = vld [vmem:[%s6 + $0x10] sm:$0xff]
        %v1351 = vld [vmem:[%s6 + $0x18] sm:$0xff]
        %v1352 = vld [vmem:[%s6 + $0x20] sm:$0xff]
        %v1353 = vld [vmem:[%s6 + $0x28] sm:$0xff]
        %v1354 = vld [vmem:[%s6 + $0x30] sm:$0xff]
        %v1355 = vld [vmem:[%s6 + $0x38] sm:$0xff]
        %1357 = vset.pattern.permute.xlu0 0
        %1358 = vperm.xlu0 %1357, %v1348
        %v1359 = vpop.permute.xlu0 %1358
        %1362 = vset.pattern.permute.xlu0 0
        %1363 = vperm.xlu0 %1362, %v1349
        %v1364 = vpop.permute.xlu0 %1363
        %1367 = vset.pattern.permute.xlu0 0
        %1368 = vperm.xlu0 %1367, %v1350
        %v1369 = vpop.permute.xlu0 %1368
        %1372 = vset.pattern.permute.xlu0 0
        %1373 = vperm.xlu0 %1372, %v1351
        %v1374 = vpop.permute.xlu0 %1373
        %1377 = vset.pattern.permute.xlu0 0
        %1378 = vperm.xlu0 %1377, %v1352
        %v1379 = vpop.permute.xlu0 %1378
        %1382 = vset.pattern.permute.xlu0 0
        %1383 = vperm.xlu0 %1382, %v1353
        %v1384 = vpop.permute.xlu0 %1383
        %1387 = vset.pattern.permute.xlu0 0
        %1388 = vperm.xlu0 %1387, %v1354
        %v1389 = vpop.permute.xlu0 %1388
        %1392 = vset.pattern.permute.xlu0 0
        %1393 = vperm.xlu0 %1392, %v1355
        %v1394 = vpop.permute.xlu0 %1393
        %v1404 = vunpack.c.l.b16 %v1332
        %v1405 = vunpack.c.l.b16 %v1333
        %v1406 = vunpack.c.l.b16 %v1334
        %v1407 = vunpack.c.l.b16 %v1335
        %v1408 = vunpack.c.l.b16 %v1336
        %v1409 = vunpack.c.l.b16 %v1337
        %v1410 = vunpack.c.l.b16 %v1338
        %v1411 = vunpack.c.l.b16 %v1339
        %v1412 = vpack.c.b16 %v1405, %v1404
        %v1413 = vpack.c.b16 %v1407, %v1406
        %v1414 = vpack.c.b16 %v1409, %v1408
        %v1415 = vpack.c.b16 %v1411, %v1410
        %1420 = vmatprep.subr.bf16.mxu0 0
        %1421 = vmatpush1.bf16.msra.mxu0 %v1340
        %1422 = vmatprep.subr.bf16.mxu0 0
        %1423 = vmatpush1.bf16.msra.mxu0 %v1341
        %1424 = vmatprep.subr.bf16.mxu0 0
        %1425 = vmatpush1.bf16.msra.mxu0 %v1342
        %1426 = vmatprep.subr.bf16.mxu0 0
        %1427 = vmatpush1.bf16.msra.mxu0 %v1343
        %1428 = vmatprep.subr.bf16.mxu0 0
        %1429 = vmatpush1.bf16.msra.mxu0 %v1344
        %1430 = vmatprep.subr.bf16.mxu0 0
        %1431 = vmatpush1.bf16.msra.mxu0 %v1345
        %1432 = vmatprep.subr.bf16.mxu0 0
        %1433 = vmatpush1.bf16.msra.mxu0 %v1346
        %1434 = vmatprep.subr.bf16.mxu0 0
        %1435 = vmatpush1.bf16.msra.mxu0 %v1347
        %1436 = vmatprep.subr.bf16.mxu0 0
        %1437 = vmatpush1.bf16.msra.mxu0 0
        %1438 = vmatprep.subr.bf16.mxu0 0
        %1439 = vmatpush1.bf16.msra.mxu0 0
        %1440 = vmatprep.subr.bf16.mxu0 0
        %1441 = vmatpush1.bf16.msra.mxu0 0
        %1442 = vmatprep.subr.bf16.mxu0 0
        %1443 = vmatpush1.bf16.msra.mxu0 0
        %1444 = vmatprep.subr.bf16.mxu0 0
        %1445 = vmatpush1.bf16.msra.mxu0 0
        %1446 = vmatprep.subr.bf16.mxu0 0
        %1447 = vmatpush1.bf16.msra.mxu0 0
        %1448 = vmatprep.subr.bf16.mxu0 0
        %1449 = vmatpush1.bf16.msra.mxu0 0
        %1450 = vmatprep.subr.bf16.mxu0 0
        %1451 = vmatpush1.bf16.msra.mxu0 0
        %1452 = vmatprep.mubr.bf16.mxu0 0
        %1453 = vmatmul.mubr.bf16.gmra.mrb[0].mxu0 %v1412
        %v1454 = vpop.f32.mrb[0].mxu0
        %v1455 = vadd.f32 %v1359, %v1454
        %v1456 = vpop.f32.mrb[0].mxu0
        %v1457 = vpop.f32.mrb[0].mxu0
        %v1458 = vadd.f32 %v1364, %v1457
        %v1459 = vpop.f32.mrb[0].mxu0
        %1460 = vmatprep.mubr.bf16.mxu0 0
        %1461 = vmatmul.mubr.bf16.gmra.mrb[0].mxu0 %v1413
        %v1462 = vpop.f32.mrb[0].mxu0
        %v1463 = vadd.f32 %v1369, %v1462
        %v1464 = vpop.f32.mrb[0].mxu0
        %v1465 = vpop.f32.mrb[0].mxu0
        %v1466 = vadd.f32 %v1374, %v1465
        %v1467 = vpop.f32.mrb[0].mxu0
        %1468 = vmatprep.mubr.bf16.mxu0 0
        %1469 = vmatmul.mubr.bf16.gmra.mrb[0].mxu0 %v1414
        %v1470 = vpop.f32.mrb[0].mxu0
        %v1471 = vadd.f32 %v1379, %v1470
        %v1472 = vpop.f32.mrb[0].mxu0
        %v1473 = vpop.f32.mrb[0].mxu0
        %v1474 = vadd.f32 %v1384, %v1473
        %v1475 = vpop.f32.mrb[0].mxu0
        %1476 = vmatprep.mubr.bf16.mxu0 0
        %1477 = vmatmul.mubr.bf16.gmra.mrb[0].mxu0 %v1415
        %v1478 = vpop.f32.mrb[0].mxu0
        %v1479 = vadd.f32 %v1389, %v1478
        %v1480 = vpop.f32.mrb[0].mxu0
        %v1481 = vpop.f32.mrb[0].mxu0
        %v1482 = vadd.f32 %v1394, %v1481
        %v1483 = vpop.f32.mrb[0].mxu0
        %1484 = vdwg.mxu0
        %v1485 = vmax.f32 %v1455, 0.0
        %v1486 = vmax.f32 %v1458, 0.0
        %v1487 = vmax.f32 %v1463, 0.0
        %v1488 = vmax.f32 %v1466, 0.0
        %v1489 = vmax.f32 %v1471, 0.0
        %v1490 = vmax.f32 %v1474, 0.0
        %v1491 = vmax.f32 %v1479, 0.0
        %v1492 = vmax.f32 %v1482, 0.0
        %v1493 = vld [vmem:[%s7] sm:$0x1]
        %v1494 = vpack.c.bf16 %v1486, %v1485
        %v1495 = vpack.c.bf16 %v1488, %v1487
        %v1496 = vpack.c.bf16 %v1490, %v1489
        %v1497 = vpack.c.bf16 %v1492, %v1491
        %v1498 = vld [vmem:[#allocation2] sm:$0x1]
        %1500 = vset.pattern.permute.xlu0 0
        %1501 = vperm.xlu0 %1500, %v1498
        %v1502 = vpop.permute.xlu0 %1501
        %v1504 = vlaneseq
        %v1505 = vshrl.u32 %v1504, 7
        %v1506 = vsub.s32 0, %v1505
        %v1507 = vrot.slane %v1502, %v1506
        %vm1508 = vcmask 523264
        %v1510 = vsel %vm1508, %v1493, 0
        %1512 = vmatprep.subr.bf16.mxu0 0
        %1513 = vmatpush1.bf16.msra.mxu0 %v1494
        %1514 = vmatprep.subr.bf16.mxu0 0
        %1515 = vmatpush1.bf16.msra.mxu0 %v1495
        %1516 = vmatprep.subr.bf16.mxu0 0
        %1517 = vmatpush1.bf16.msra.mxu0 %v1496
        %1518 = vmatprep.subr.bf16.mxu0 0
        %1519 = vmatpush1.bf16.msra.mxu0 %v1497
        %1520 = vmatprep.subr.bf16.mxu0 0
        %1521 = vmatpush1.bf16.msra.mxu0 0
        %1522 = vmatprep.subr.bf16.mxu0 0
        %1523 = vmatpush1.bf16.msra.mxu0 0
        %1524 = vmatprep.subr.bf16.mxu0 0
        %1525 = vmatpush1.bf16.msra.mxu0 0
        %1526 = vmatprep.subr.bf16.mxu0 0
        %1527 = vmatpush1.bf16.msra.mxu0 0
        %1528 = vmatprep.subr.bf16.mxu0 0
        %1529 = vmatpush1.bf16.msra.mxu0 0
        %1530 = vmatprep.subr.bf16.mxu0 0
        %1531 = vmatpush1.bf16.msra.mxu0 0
        %1532 = vmatprep.subr.bf16.mxu0 0
        %1533 = vmatpush1.bf16.msra.mxu0 0
        %1534 = vmatprep.subr.bf16.mxu0 0
        %1535 = vmatpush1.bf16.msra.mxu0 0
        %1536 = vmatprep.subr.bf16.mxu0 0
        %1537 = vmatpush1.bf16.msra.mxu0 0
        %1538 = vmatprep.subr.bf16.mxu0 0
        %1539 = vmatpush1.bf16.msra.mxu0 0
        %1540 = vmatprep.subr.bf16.mxu0 0
        %1541 = vmatpush1.bf16.msra.mxu0 0
        %1542 = vmatprep.subr.bf16.mxu0 0
        %1543 = vmatpush1.bf16.msra.mxu0 0
        %1544 = vmatprep.mubr.bf16.mxu0 0
        %1545 = vmatmul.mubr.bf16.gmra.mrb[0].mxu0 %v1510
        %v1546 = vpop.f32.mrb[0].mxu0
        %v1547 = vadd.f32 %v1507, %v1546
        %v1548 = vpop.f32.mrb[0].mxu0
        %v1549 = vpop.f32.mrb[0].mxu0
        %v1550 = vpop.f32.mrb[0].mxu0
        %1551 = vdwg.mxu0
        %v1552 = vxor.u32 %v1547, 2147483648
        %v1553 = vmul.f32 %v1552, 1.442695
        %v1554 = vpow.pop %v1553
        %v1555 = vadd.f32 %v1554, 1.0
        %v1556 = vrcp.pop %v1555
        %v1557 = vmul.f32 1.0, %v1556
        %1558 = vst [vmem:[%s324] sm:$0x1] %v1557
        %s1559 = sand.u32 %s227, 1
        %s1560 = scalar_lea.sflag [#allocation4], %s1559
        %s1561 = sand.u32 %s227, 1
        %s1562 = scalar_lea.vmem [#allocation3], %s1561
        // Predicated region
        $region57: #{tpu_custom_call.1} parent=55 // pred_check
          %p1563 = pneg %p237
        $region58: #{tpu_custom_call.1} parent=55 // pred_check_branch
          %1565 = sbr.rel (%p1563) target = $region60
        $region59: #{tpu_custom_call.1} parent=55 // pred_region
          %s1567 = ssub.s32 16, 16
          %1568 = vsyncadd %s1560, %s1567
          %s1569 = smul.addr %s25, 16
          %s1570 = scalar_lea.hbm %s9, %s1569
          %s1572 = sshll.u32 %s1562, 4
          %s1573 = int_to_ptr.vmem [resolvable:$true] %s1572
          %1575 = dma.vmem_to_hbm [thread:$0]  %s1573, 16, %s1570, %s1560
        $region60: #{tpu_custom_call.1} parent=55 // pred_fallthru
          _
      $region56: #{tpu_custom_call.1} parent=5 // pred_fallthru
        _
      %p1576 = scmp.le.s32.totalorder 2, %s20
      // Predicated region
      $region61: #{tpu_custom_call.1} parent=5 // pred_check
        %p1577 = pneg %p1576
      $region62: #{tpu_custom_call.1} parent=5 // pred_check_branch
        %1579 = sbr.rel (%p1577) target = $region64
      $region63: #{tpu_custom_call.1} parent=5 // pred_region
        %s1580 = ssub.s32 %s20, 2
        // Predicated region
        $region65: #{tpu_custom_call.1} parent=63 // pred_check
          %p1581 = pneg %p243
        $region66: #{tpu_custom_call.1} parent=63 // pred_check_branch
          %1583 = sbr.rel (%p1581) target = $region68
        $region67: #{tpu_custom_call.1} parent=63 // pred_region
          %s1584 = sand.u32 %s228, 1
          %s1585 = scalar_lea.sflag [#allocation4], %s1584
          %s1586 = sand.u32 %s228, 1
          %s1587 = scalar_lea.vmem [#allocation3], %s1586
          %1588 = dma.done %s1585, 16
        $region68: #{tpu_custom_call.1} parent=63 // pred_fallthru
          _
      $region64: #{tpu_custom_call.1} parent=5 // pred_fallthru
        _
    $region6: #{tpu_custom_call.1} parent=1 // loop_footer
      %s24 = sadd.s32 1, %s20
    $region7: #{tpu_custom_call.1} parent=1 // loop_footer_branch
      %19 = sbr.rel target = $region3
    $region8: #{tpu_custom_call.1} parent=1 // loop_exit
      _
    %1589 = vsyncpa [#allocation4], 1
    %s1590 = scalar_lea.sflag [#allocation4], 1
    %1591 = vsyncpa %s1590, 1

</llo_original>
